<compile_context>
chip_gen: v7x
topology: tpu7x:2x2x1
jax: 0.10.0
libtpu: 0.0.40
codegen_flags: <defaults>
</compile_context>

<pallas_src>
import functools

import numpy as np
import jax
import jax.numpy as jnp
from jax.experimental import pallas as pl
from jax.experimental.pallas import tpu as pltpu

_LANE = 128
_SUBLANE = 8
_MAX_UNROLL = 64          # cap on the in-kernel unrolled loop over output tiles


def _round_up(x: int, m: int) -> int:
    return (x + m - 1) // m * m


@functools.lru_cache(maxsize=None)
def _vmem_policy():
    """Generation-aware (budget, vmem_limit, max_row_tile, vmem_capacity)."""
    try:
        vmem = int(getattr(pltpu.get_tpu_info(), "vmem_capacity_bytes",
                           64 * 1024 * 1024))
    except Exception:
        vmem = 64 * 1024 * 1024
    # ~48 MiB limit / 24 MiB budget on v7x (64 MiB VMEM);
    # ~96 MiB limit / 48 MiB budget on v5e/v6e (128 MiB VMEM).
    vmem_limit = min(vmem * 3 // 4, 112 * 1024 * 1024)
    budget = min(vmem * 3 // 8, 56 * 1024 * 1024)
    max_rows = 512 if vmem <= 64 * 1024 * 1024 else 1024
    return budget, vmem_limit, max_rows, vmem


@functools.lru_cache(maxsize=None)
def _band_and_starts(T: int, kernel_size: int, stride: int,
                     tile_l: int, num_lt: int, L_out: int):
    """Banded 0/1 selection matrices (num_lt, k_win, tile_l) + per-tile x-window starts."""
    k_win = min((tile_l - 1) * stride + kernel_size, T)
    starts = tuple(min(t * tile_l * stride, T - k_win) for t in range(num_lt))
    band = np.zeros((num_lt, k_win, tile_l), dtype=np.float32)
    for t in range(num_lt):
        s = starts[t]
        for c in range(tile_l):
            j = t * tile_l + c
            if j >= L_out:
                break                       # padding columns stay zero
            r0 = j * stride - s             # window offset inside the band rows
            band[t, r0:r0 + kernel_size, c] = 1.0
    return band, starts, k_win


def _make_kernel(n_in: int, num_lt: int, tile_l: int, k_win: int,
                 starts, inv_k: float):
    def kernel(*refs):
        x_refs = refs[:n_in]
        band_ref = refs[n_in]
        o_refs = refs[n_in + 1:]
        # Static unrolled loop over output tiles: static x slices + one MXU dot
        # per (input plane, tile); 1/kernel_size applied on the f32 accumulator.
        for t in range(num_lt):
            s = starts[t]
            band_t = band_ref[t]                       # (k_win, tile_l)
            for x_ref, o_ref in zip(x_refs, o_refs):
                acc = jnp.dot(x_ref[:, s:s + k_win], band_t,
                              preferred_element_type=jnp.float32)
                o_ref[:, t * tile_l:(t + 1) * tile_l] = (
                    acc * inv_k).astype(o_ref.dtype)
    return kernel


def _pool_rows(xs, kernel_size: int, stride: int):
    """Average-pool each 2-D (N, T) array in `xs` along its last axis."""
    n_in = len(xs)
    N, T = xs[0].shape
    dtype = xs[0].dtype
    itemsize = dtype.itemsize
    L_out = (T - kernel_size) // stride + 1
    if L_out <= 0:
        raise ValueError(
            f"kernel_size={kernel_size} does not fit input length {T}")

    # Output-tile width: 128 keeps the matmul memory-bound on all generations;
    # grow it only to cap the unrolled in-kernel loop for very long pooled axes.
    tile_l = _LANE
    num_lt = pl.cdiv(L_out, tile_l)
    if num_lt > _MAX_UNROLL:
        tile_l = _round_up(pl.cdiv(L_out, _MAX_UNROLL), _LANE)
        num_lt = pl.cdiv(L_out, tile_l)
    L_pad = num_lt * tile_l

    band_np, starts, k_win = _band_and_starts(
        T, kernel_size, stride, tile_l, num_lt, L_out)
    band = jnp.asarray(band_np).astype(dtype)   # 0/1 weights: exact in bf16 too

    # Row tile: inputs/outputs double-buffered, band resident (single copy).
    budget, vmem_limit, max_rows, vmem_cap = _vmem_policy()
    band_bytes = int(band.size) * itemsize
    per_row = n_in * 2 * (T + L_pad) * itemsize
    avail = max(budget - band_bytes, _SUBLANE * per_row)
    tile_n = max(_SUBLANE,
                 min(max_rows, (avail // per_row) // _SUBLANE * _SUBLANE))
    tile_n = min(tile_n, _round_up(N, _SUBLANE))
    if N >= 2 * _SUBLANE:
        # Keep >= 2 row steps so 2-TC chips (v7x) can shard the row axis.
        tile_n = min(tile_n, _round_up(pl.cdiv(N, 2), _SUBLANE))
    if band_bytes + _SUBLANE * per_row > budget:
        # Best effort for pathological (huge kernel/stride) shapes.
        vmem_limit = max(vmem_limit,
                         min(vmem_cap * 7 // 8,
                             band_bytes + _SUBLANE * per_row + (16 << 20)))
    # TODO(synk): for extreme kernel_size/stride the resident band can still
    # outgrow VMEM; a strided-sum VPU path would cover that regime.

    grid = (pl.cdiv(N, tile_n),)
    x_spec = pl.BlockSpec((tile_n, T), lambda i: (i, 0))
    band_spec = pl.BlockSpec((num_lt, k_win, tile_l), lambda i: (0, 0, 0))
    o_spec = pl.BlockSpec((tile_n, L_pad), lambda i: (i, 0))

    cost = pl.CostEstimate(
        flops=2 * n_in * N * num_lt * k_win * tile_l,
        transcendentals=0,
        bytes_accessed=itemsize * n_in * N * (T + L_pad) + band_bytes)

    outs = pl.pallas_call(
        _make_kernel(n_in, num_lt, tile_l, k_win, starts, 1.0 / kernel_size),
        out_shape=tuple(jax.ShapeDtypeStruct((N, L_pad), dtype)
                        for _ in range(n_in)),
        grid=grid,
        in_specs=[x_spec] * n_in + [band_spec],
        out_specs=tuple(o_spec for _ in range(n_in)),
        compiler_params=pltpu.CompilerParams(
            dimension_semantics=("parallel",),   # row axis is embarrassingly parallel
            vmem_limit_bytes=vmem_limit),
        cost_estimate=cost,
    )(*xs, band)
    if not isinstance(outs, (tuple, list)):
        outs = (outs,)

    if L_out != L_pad:   # slice lane padding only when actually present
        outs = tuple(o[:, :L_out] for o in outs)
    return tuple(outs)


def avg_pooling_forward(x: jnp.ndarray, kernel_size: int, stride: int) -> jnp.ndarray:
    """JAX/Pallas equivalent of AvgPooling.forward (any-rank input, complex ok)."""
    orig_shape = x.shape
    T = orig_shape[-1]

    # TPU has no f64 path: downcast wide dtypes explicitly.
    if x.dtype == jnp.complex128:
        x = x.astype(jnp.complex64)
    elif x.dtype == jnp.float64:
        x = x.astype(jnp.float32)

    if jnp.iscomplexobj(x):
        # Real / imag planes go through ONE pallas_call as two inputs/outputs
        # (no concatenated HBM copy; single resident band, shared pipeline).
        # TODO(synk): a complex64 -> f32 bitcast with an interleaved 2x-column
        # band would also skip the real/imag de-interleave passes entirely.
        xr = jnp.real(x).reshape(-1, T)
        xi = jnp.imag(x).reshape(-1, T)
        yr, yi = _pool_rows((xr, xi), kernel_size, stride)
        y = jax.lax.complex(yr, yi)
    else:
        (y,) = _pool_rows((x.reshape(-1, T),), kernel_size, stride)
    return y.reshape(orig_shape[:-1] + (y.shape[-1],))


def _reference(x: jnp.ndarray, kernel_size: int, stride: int) -> jnp.ndarray:
    """Pure-JAX reference matching torch.nn.AvgPool1d (no padding, floor mode)."""
    T = x.shape[-1]
    L_out = (T - kernel_size) // stride + 1
    idx = jnp.arange(L_out)[:, None] * stride + jnp.arange(kernel_size)[None, :]
    return x[..., idx].mean(axis=-1)


if __name__ == "__main__":
    key = jax.random.PRNGKey(0)
    k_re, k_im, k_big = jax.random.split(key, 3)

    # Small complex input consistent with the module (pool along last axis).
    B, C, J, T = 2, 4, 3, 16
    kernel_size, stride = 4, 2
    x_re = jax.random.normal(k_re, (B, C, J, T), dtype=jnp.float32)
    x_im = jax.random.normal(k_im, (B, C, J, T), dtype=jnp.float32)
    x = jax.lax.complex(x_re, x_im)            # complex64, shape (2, 4, 3, 16)

    y = jax.block_until_ready(avg_pooling_forward(x, kernel_size, stride))
    y_ref = _reference(x, kernel_size, stride)
    L_out = (T - kernel_size) // stride + 1
    assert y.shape == x.shape[:-1] + (L_out,)
    assert jnp.allclose(y.real, y_ref.real, atol=1e-5, rtol=1e-5)
    assert jnp.allclose(y.imag, y_ref.imag, atol=1e-5, rtol=1e-5)

    # Real path, same small shape.
    y_real = jax.block_until_ready(avg_pooling_forward(x_re, kernel_size, stride))
    assert jnp.allclose(y_real, _reference(x_re, kernel_size, stride),
                        atol=1e-5, rtol=1e-5)

    # Longer pooled axis to exercise the banded multi-tile path.
    x_big = jax.random.normal(k_big, (2, 3, 2048), dtype=jnp.float32)
    y_big = jax.block_until_ready(avg_pooling_forward(x_big, 4, 2))
    assert y_big.shape == (2, 3, (2048 - 4) // 2 + 1)
    assert jnp.allclose(y_big, _reference(x_big, 4, 2), atol=1e-5, rtol=1e-5)

    print("KERNEL_OK")
</pallas_src>

<mosaic_0001>
module attributes {stable_mosaic.version = 11 : i64} {
  func.func @kernel(%arg0: i32, %arg1: memref<16x16xf32, #tpu.memory_space<vmem>>, %arg2: memref<16x16xf32, #tpu.memory_space<vmem>>, %arg3: memref<1x16x128xf32, #tpu.memory_space<vmem>>, %arg4: memref<16x128xf32, #tpu.memory_space<vmem>>, %arg5: memref<16x128xf32, #tpu.memory_space<vmem>>) attributes {dimension_semantics = [#tpu.dimension_semantics<parallel>], iteration_bounds = array<i64: 2>, scalar_prefetch = 0 : i64, scratch_operands = 0 : i64, tpu.core_type = #tpu.core_type<tc>, window_params = [{transform_indices = @transform_0, window_bounds = array<i64: 16, 16>}, {transform_indices = @transform_1, window_bounds = array<i64: 16, 16>}, {pipeline_mode = #tpu.pipeline_mode<synchronous>, transform_indices = @transform_2, window_bounds = array<i64: 1, 16, 128>}, {transform_indices = @transform_3, window_bounds = array<i64: 16, 128>}, {transform_indices = @transform_4, window_bounds = array<i64: 16, 128>}]} {
    %c0 = arith.constant 0 : index
    %c0_0 = arith.constant 0 : index
    %c0_1 = arith.constant 0 : index
    %0 = vector.load %arg3[%c0, %c0_0, %c0_1] : memref<1x16x128xf32, #tpu.memory_space<vmem>>, vector<1x16x128xf32>
    %1 = vector.shape_cast %0 : vector<1x16x128xf32> to vector<16x128xf32>
    %c0_2 = arith.constant 0 : index
    %c0_3 = arith.constant 0 : index
    %2 = vector.load %arg1[%c0_2, %c0_3] : memref<16x16xf32, #tpu.memory_space<vmem>>, vector<16x16xf32>
    %cst = arith.constant dense<0.000000e+00> : vector<16x128xf32>
    %3 = tpu.matmul %2, %1, %cst {dimension_numbers = #tpu.dot_dimension_numbers<[1], [0], [0], [1], [0, 0, 1, 1], [], []>} : vector<16x16xf32>, vector<16x128xf32>, vector<16x128xf32> -> vector<16x128xf32>
    %cst_4 = arith.constant 2.500000e-01 : f32
    %4 = vector.broadcast %cst_4 : f32 to vector<16x128xf32>
    %5 = arith.mulf %3, %4 : vector<16x128xf32>
    %c0_5 = arith.constant 0 : index
    %c0_6 = arith.constant 0 : index
    %6 = vector.load %arg4[%c0_5, %c0_6] : memref<16x128xf32, #tpu.memory_space<vmem>>, vector<16x128xf32>
    tpu.vector_store %arg4[%c0_5, %c0_6], %5 {strides = array<i32>} : memref<16x128xf32, #tpu.memory_space<vmem>>, vector<16x128xf32>,
    %c0_7 = arith.constant 0 : index
    %c0_8 = arith.constant 0 : index
    %7 = vector.load %arg2[%c0_7, %c0_8] : memref<16x16xf32, #tpu.memory_space<vmem>>, vector<16x16xf32>
    %cst_9 = arith.constant dense<0.000000e+00> : vector<16x128xf32>
    %8 = tpu.matmul %7, %1, %cst_9 {dimension_numbers = #tpu.dot_dimension_numbers<[1], [0], [0], [1], [0, 0, 1, 1], [], []>} : vector<16x16xf32>, vector<16x128xf32>, vector<16x128xf32> -> vector<16x128xf32>
    %cst_10 = arith.constant 2.500000e-01 : f32
    %9 = vector.broadcast %cst_10 : f32 to vector<16x128xf32>
    %10 = arith.mulf %8, %9 : vector<16x128xf32>
    %c0_11 = arith.constant 0 : index
    %c0_12 = arith.constant 0 : index
    %11 = vector.load %arg5[%c0_11, %c0_12] : memref<16x128xf32, #tpu.memory_space<vmem>>, vector<16x128xf32>
    tpu.vector_store %arg5[%c0_11, %c0_12], %10 {strides = array<i32>} : memref<16x128xf32, #tpu.memory_space<vmem>>, vector<16x128xf32>,
    return
  }
  func.func @transform_0(%arg0: i32) -> (i32, i32) {
    %c0_i32 = arith.constant 0 : i32
    %c0_i32_0 = arith.constant 0 : i32
    return %arg0, %c0_i32 : i32, i32
  }
  func.func @transform_1(%arg0: i32) -> (i32, i32) {
    %c0_i32 = arith.constant 0 : i32
    %c0_i32_0 = arith.constant 0 : i32
    return %arg0, %c0_i32 : i32, i32
  }
  func.func @transform_2(%arg0: i32) -> (i32, i32, i32) {
    %c0_i32 = arith.constant 0 : i32
    %c0_i32_0 = arith.constant 0 : i32
    %c0_i32_1 = arith.constant 0 : i32
    %c0_i32_2 = arith.constant 0 : i32
    return %c0_i32, %c0_i32_0, %c0_i32_1 : i32, i32, i32
  }
  func.func @transform_3(%arg0: i32) -> (i32, i32) {
    %c0_i32 = arith.constant 0 : i32
    %c0_i32_0 = arith.constant 0 : i32
    return %arg0, %c0_i32 : i32, i32
  }
  func.func @transform_4(%arg0: i32) -> (i32, i32) {
    %c0_i32 = arith.constant 0 : i32
    %c0_i32_0 = arith.constant 0 : i32
    return %arg0, %c0_i32 : i32, i32
  }
}

</mosaic_0001>

<llo_original>
// kernel: tpu_custom_call.1
$region0: #{tpu_custom_call.1}
  #allocation0 [shape = 'u32[]', space=smem, size = 0x4, offset = 0x4, fixed_abs, tag = 'smem constant byte address 0x4 - core index']
  #allocation1 [shape = 'u32[144,128]{1,0:T(1,128)}', space=vmem, size = 0x12000, scoped, tag = 'internal scratch']
  %s0 = inlined_call_operand.vmem [shape: f32[24,16], index: 0, kind: input, shape index: {}]
  %s1 = inlined_call_operand.vmem [shape: f32[24,16], index: 1, kind: input, shape index: {}]
  %s2 = inlined_call_operand.vmem [shape: f32[1,16,128], index: 2, kind: input, shape index: {}]
  %s3 = inlined_call_operand.hbm [shape: f32[24,128], index: 3, kind: output, shape index: {0}]
  %s4 = inlined_call_operand.hbm [shape: f32[24,128], index: 4, kind: output, shape index: {1}]
  %5 = xla_tuple %s3, %s4
  %s6 = sld [smem:[#allocation0]]
  $region53: #{tpu_custom_call.1} parent=0
    _
  %s8 = ssub.s32 1, %s6
  %s9 = scalar_select 0, %s8, %s6
  $region1: #{tpu_custom_call.1} parent=0
    #allocation2 [shape = 'u8[16384]{0}', space=vmem, size = 0x4000, scoped, tag = 'output window, operand 0']
    #allocation3 [shape = 's32[2]{0}', space=sflag, size = 0x8, scoped, tag = 'scoped memory for tpu_custom_call.1']
    #allocation4 [shape = 'u8[16384]{0}', space=vmem, size = 0x4000, scoped, tag = 'output window, operand 1']
    #allocation5 [shape = 's32[2]{0}', space=sflag, size = 0x8, scoped, tag = 'scoped memory for tpu_custom_call.1']
    %10 = vsyncpa [#allocation3], 0
    %s11 = scalar_lea.sflag [#allocation3], 1
    %12 = vsyncpa %s11, 0
    %13 = vsyncpa [#allocation5], 0
    %s14 = scalar_lea.sflag [#allocation5], 1
    %15 = vsyncpa %s14, 0
    loop: start=0, step=1, limit=4
    $region2: #{tpu_custom_call.1} parent=1 // loop_pre_header
      _
    $region3: #{tpu_custom_call.1} parent=1 // loop_header
      %s17 = sphi 0, %s21
      %p18 = scmp.ge.s32.totalorder %s17, 4
      %s27 = sphi 0, %s29
      %s30 = sphi 0, %s27
      %s31 = sphi 0, %s30
      %s47 = sphi 0, %s31
      %s53 = sphi 0, %s55
      %s56 = sphi 0, %s53
      %s57 = sphi 0, %s56
      %s73 = sphi 0, %s57
      %s77 = sphi 0, %s77
      %s79 = sphi 0, %s77
      %s80 = sphi 0, %s79
      %s94 = sphi 0, %s80
      %s100 = sphi 0, %s102
      %s103 = sphi 0, %s100
      %s104 = sphi 0, %s103
      %s120 = sphi 0, %s104
      %s126 = sphi 0, %s128
      %s129 = sphi 0, %s126
      %s130 = sphi 0, %s129
      %s146 = sphi 0, %s130
    $region4: #{tpu_custom_call.1} parent=1 // loop_header_branch
      %20 = sbr.rel (%p18) target = $region8
    $region5: #{tpu_custom_call.1} parent=1 // loop_body
      %s22 = ssub.s32 %s17, 1
      %s23 = ssub.s32 %s17, 2
      %s24 = sadd.s32 %s17, 1
      %s25 = ssub.s32 %s17, %s24
      %p26 = scmp.eq.s32.totalorder %s25, 0
      %s28 = sadd.s32 %s27, 1
      %s29 = scalar_select %p26, %s27, %s28
      %p32 = pneg %p26
      %p33 = scmp.eq.s32.totalorder %s17, 1
      %p34 = por %p32, %p33
      %p35 = scmp.ne.s32.totalorder %s27, %s30
      %p36 = scmp.eq.s32.totalorder %s17, 0
      %p37 = por %p35, %p36
      %p38 = scmp.ne.s32.totalorder %s27, %s30
      %p39 = scmp.eq.s32.totalorder %s22, 1
      %p40 = por %p38, %p39
      %p41 = scmp.ne.s32.totalorder %s30, %s31
      %p42 = scmp.eq.s32.totalorder %s22, 0
      %p43 = por %p41, %p42
      %p44 = scmp.ne.s32.totalorder %s30, %s31
      %p45 = scmp.eq.s32.totalorder %s23, 1
      %p46 = por %p44, %p45
      %p48 = scmp.ne.s32.totalorder %s31, %s47
      %p49 = scmp.eq.s32.totalorder %s23, 0
      %p50 = por %p48, %p49
      %s51 = ssub.s32 %s17, %s24
      %p52 = scmp.eq.s32.totalorder %s51, 0
      %s54 = sadd.s32 %s53, 1
      %s55 = scalar_select %p52, %s53, %s54
      %p58 = pneg %p52
      %p59 = scmp.eq.s32.totalorder %s17, 1
      %p60 = por %p58, %p59
      %p61 = scmp.ne.s32.totalorder %s53, %s56
      %p62 = scmp.eq.s32.totalorder %s17, 0
      %p63 = por %p61, %p62
      %p64 = scmp.ne.s32.totalorder %s53, %s56
      %p65 = scmp.eq.s32.totalorder %s22, 1
      %p66 = por %p64, %p65
      %p67 = scmp.ne.s32.totalorder %s56, %s57
      %p68 = scmp.eq.s32.totalorder %s22, 0
      %p69 = por %p67, %p68
      %p70 = scmp.ne.s32.totalorder %s56, %s57
      %p71 = scmp.eq.s32.totalorder %s23, 1
      %p72 = por %p70, %p71
      %p74 = scmp.ne.s32.totalorder %s57, %s73
      %p75 = scmp.eq.s32.totalorder %s23, 0
      %p76 = por %p74, %p75
      %s78 = sadd.s32 %s77, 1
      %p81 = scmp.eq.s32.totalorder %s17, 1
      %p82 = scmp.ne.s32.totalorder %s77, %s79
      %p83 = scmp.eq.s32.totalorder %s17, 0
      %p84 = por %p82, %p83
      %p85 = scmp.ne.s32.totalorder %s77, %s79
      %p86 = scmp.eq.s32.totalorder %s22, 1
      %p87 = por %p85, %p86
      %p88 = scmp.ne.s32.totalorder %s79, %s80
      %p89 = scmp.eq.s32.totalorder %s22, 0
      %p90 = por %p88, %p89
      %p91 = scmp.ne.s32.totalorder %s79, %s80
      %p92 = scmp.eq.s32.totalorder %s23, 1
      %p93 = por %p91, %p92
      %p95 = scmp.ne.s32.totalorder %s80, %s94
      %p96 = scmp.eq.s32.totalorder %s23, 0
      %p97 = por %p95, %p96
      %s98 = ssub.s32 %s17, %s24
      %p99 = scmp.eq.s32.totalorder %s98, 0
      %s101 = sadd.s32 %s100, 1
      %s102 = scalar_select %p99, %s100, %s101
      %p105 = pneg %p99
      %p106 = scmp.eq.s32.totalorder %s17, 1
      %p107 = por %p105, %p106
      %p108 = scmp.ne.s32.totalorder %s100, %s103
      %p109 = scmp.eq.s32.totalorder %s17, 0
      %p110 = por %p108, %p109
      %p111 = scmp.ne.s32.totalorder %s100, %s103
      %p112 = scmp.eq.s32.totalorder %s22, 1
      %p113 = por %p111, %p112
      %p114 = scmp.ne.s32.totalorder %s103, %s104
      %p115 = scmp.eq.s32.totalorder %s22, 0
      %p116 = por %p114, %p115
      %p117 = scmp.ne.s32.totalorder %s103, %s104
      %p118 = scmp.eq.s32.totalorder %s23, 1
      %p119 = por %p117, %p118
      %p121 = scmp.ne.s32.totalorder %s104, %s120
      %p122 = scmp.eq.s32.totalorder %s23, 0
      %p123 = por %p121, %p122
      %s124 = ssub.s32 %s17, %s24
      %p125 = scmp.eq.s32.totalorder %s124, 0
      %s127 = sadd.s32 %s126, 1
      %s128 = scalar_select %p125, %s126, %s127
      %p131 = pneg %p125
      %p132 = scmp.eq.s32.totalorder %s17, 1
      %p133 = por %p131, %p132
      %p134 = scmp.ne.s32.totalorder %s126, %s129
      %p135 = scmp.eq.s32.totalorder %s17, 0
      %p136 = por %p134, %p135
      %p137 = scmp.ne.s32.totalorder %s126, %s129
      %p138 = scmp.eq.s32.totalorder %s22, 1
      %p139 = por %p137, %p138
      %p140 = scmp.ne.s32.totalorder %s129, %s130
      %p141 = scmp.eq.s32.totalorder %s22, 0
      %p142 = por %p140, %p141
      %p143 = scmp.ne.s32.totalorder %s129, %s130
      %p144 = scmp.eq.s32.totalorder %s23, 1
      %p145 = por %p143, %p144
      %p147 = scmp.ne.s32.totalorder %s130, %s146
      %p148 = scmp.eq.s32.totalorder %s23, 0
      %p149 = por %p147, %p148
      %p150 = scmp.le.s32.totalorder 1, %s17
      %p151 = scmp.lt.s32.totalorder %s17, 3
      %p152 = pnand %p150, %p151
      %p153 = pneg %p152
      // Predicated region
      $region9: #{tpu_custom_call.1} parent=5 // pred_check
        _
      $region10: #{tpu_custom_call.1} parent=5 // pred_check_branch
        %155 = sbr.rel (%p152) target = $region12
      $region11: #{tpu_custom_call.1} parent=5 // pred_region
        %s156 = ssub.s32 %s17, 1
        // Predicated region
        $region13: #{tpu_custom_call.1} parent=11 // pred_check
          %p157 = pneg %p90
        $region14: #{tpu_custom_call.1} parent=11 // pred_check_branch
          %159 = sbr.rel (%p157) target = $region16
        $region15: #{tpu_custom_call.1} parent=11 // pred_region
          _
        $region16: #{tpu_custom_call.1} parent=11 // pred_fallthru
          _
      $region12: #{tpu_custom_call.1} parent=5 // pred_fallthru
        _
      %p160 = scmp.lt.s32.totalorder %s17, 2
      // Predicated region
      $region17: #{tpu_custom_call.1} parent=5 // pred_check
        %p161 = pneg %p160
      $region18: #{tpu_custom_call.1} parent=5 // pred_check_branch
        %163 = sbr.rel (%p161) target = $region20
      $region19: #{tpu_custom_call.1} parent=5 // pred_region
        // Predicated region
        $region21: #{tpu_custom_call.1} parent=19 // pred_check
          %p164 = pneg %p37
        $region22: #{tpu_custom_call.1} parent=19 // pred_check_branch
          %166 = sbr.rel (%p164) target = $region24
        $region23: #{tpu_custom_call.1} parent=19 // pred_region
          %s167 = smul.u32 2, %s17
          %s168 = ssub.s32 3, %s167
          %p169 = scmp.lt.s32.totalorder %s168, 2
          %s170 = scalar_select %p169, %s168, 2
          %s171 = smul.u32 128, %s170
          %p172 = scmp.lt.s32.totalorder %s167, 2
          %s173 = scalar_select %p172, %s167, 2
          %s174 = smul.addr %s173, 8
          %s175 = scalar_lea.vmem %s0, %s174
          %s176 = smul.u32 2, %s17
          %s177 = ssub.s32 3, %s176
          %p178 = scmp.lt.s32.totalorder %s177, 2
          %s179 = scalar_select %p178, %s177, 2
          %s180 = smul.u32 128, %s179
        $region24: #{tpu_custom_call.1} parent=19 // pred_fallthru
          _
        // Predicated region
        $region25: #{tpu_custom_call.1} parent=19 // pred_check
          %p181 = pneg %p63
        $region26: #{tpu_custom_call.1} parent=19 // pred_check_branch
          %183 = sbr.rel (%p181) target = $region28
        $region27: #{tpu_custom_call.1} parent=19 // pred_region
          %s184 = smul.u32 2, %s17
          %s185 = ssub.s32 3, %s184
          %p186 = scmp.lt.s32.totalorder %s185, 2
          %s187 = scalar_select %p186, %s185, 2
          %s188 = smul.u32 128, %s187
          %p189 = scmp.lt.s32.totalorder %s184, 2
          %s190 = scalar_select %p189, %s184, 2
          %s191 = smul.addr %s190, 8
          %s192 = scalar_lea.vmem %s1, %s191
          %s193 = smul.u32 2, %s17
          %s194 = ssub.s32 3, %s193
          %p195 = scmp.lt.s32.totalorder %s194, 2
          %s196 = scalar_select %p195, %s194, 2
          %s197 = smul.u32 128, %s196
        $region28: #{tpu_custom_call.1} parent=19 // pred_fallthru
          _
      $region20: #{tpu_custom_call.1} parent=5 // pred_fallthru
        _
      %p198 = scmp.le.s32.totalorder 1, %s17
      %p199 = scmp.lt.s32.totalorder %s17, 3
      %p200 = pnand %p198, %p199
      %p201 = pneg %p200
      // Predicated region
      $region29: #{tpu_custom_call.1} parent=5 // pred_check
        _
      $region30: #{tpu_custom_call.1} parent=5 // pred_check_branch
        %203 = sbr.rel (%p200) target = $region32
      $region31: #{tpu_custom_call.1} parent=5 // pred_region
        %s204 = ssub.s32 %s17, 1
        %s205 = smul.u32 2, %s22
        %s206 = ssub.s32 3, %s205
        %p207 = scmp.lt.s32.totalorder %s206, 2
        %s208 = scalar_select %p207, %s206, 2
        %s209 = smul.u32 128, %s208
        %p210 = scmp.lt.s32.totalorder %s205, 2
        %s211 = scalar_select %p210, %s205, 2
        %s212 = smul.addr %s211, 8
        %s213 = scalar_lea.vmem %s0, %s212
        %p214 = pneg %p43
        %p215 = pneg %p40
        %s216 = smul.u32 2, %s22
        %s217 = ssub.s32 3, %s216
        %p218 = scmp.lt.s32.totalorder %s217, 2
        %s219 = scalar_select %p218, %s217, 2
        %s220 = smul.u32 128, %s219
        %p221 = scmp.lt.s32.totalorder %s216, 2
        %s222 = scalar_select %p221, %s216, 2
        %s223 = smul.addr %s222, 8
        %s224 = scalar_lea.vmem %s1, %s223
        %p225 = pneg %p69
        %p226 = pneg %p66
        %p227 = pneg %p90
        %p228 = pneg %p87
        %p229 = pneg %p116
        %p230 = pneg %p113
        %s231 = sand.u32 %s103, 1
        %s232 = scalar_lea.sflag [#allocation3], %s231
        %s233 = sand.u32 %s103, 1
        %s234 = smul.addr %s233, 16
        %s235 = scalar_lea.vmem [#allocation2], %s234
        %p236 = pneg %p142
        %p237 = pneg %p139
        %s238 = sand.u32 %s129, 1
        %s239 = scalar_lea.sflag [#allocation5], %s238
        %s240 = sand.u32 %s129, 1
        %s241 = smul.addr %s240, 16
        %s242 = scalar_lea.vmem [#allocation4], %s241
        %s243 = smul.u32 2, %s22
        %s244 = ssub.s32 3, %s243
        %p245 = scmp.lt.s32.totalorder %s244, 2
        %s246 = scalar_select %p245, %s244, 2
        %s247 = smul.u32 128, %s246
        %p248 = scmp.lt.s32.totalorder %s243, 2
        %s249 = scalar_select %p248, %s243, 2
        %s250 = smul.addr %s249, 8
        %s251 = scalar_lea.vmem %s0, %s250
        %s252 = smul.u32 2, %s22
        %s253 = ssub.s32 3, %s252
        %p254 = scmp.lt.s32.totalorder %s253, 2
        %s255 = scalar_select %p254, %s253, 2
        %s256 = smul.u32 128, %s255
        %s257 = smul.u32 2, %s22
        %s258 = ssub.s32 3, %s257
        %p259 = scmp.lt.s32.totalorder %s258, 2
        %s260 = scalar_select %p259, %s258, 2
        %s261 = smul.u32 128, %s260
        %p262 = scmp.lt.s32.totalorder %s257, 2
        %s263 = scalar_select %p262, %s257, 2
        %s264 = smul.addr %s263, 8
        %s265 = scalar_lea.vmem %s1, %s264
        %s266 = smul.u32 2, %s22
        %s267 = ssub.s32 3, %s266
        %p268 = scmp.lt.s32.totalorder %s267, 2
        %s269 = scalar_select %p268, %s267, 2
        %s270 = smul.u32 128, %s269
        %s271 = smul.u32 2, %s22
        %s272 = ssub.s32 3, %s271
        %p273 = scmp.lt.s32.totalorder %s272, 2
        %s274 = scalar_select %p273, %s272, 2
        %s275 = smul.u32 128, %s274
        %s276 = smul.u32 2, %s22
        %s277 = ssub.s32 3, %s276
        %p278 = scmp.lt.s32.totalorder %s277, 2
        %s279 = scalar_select %p278, %s277, 2
        %s280 = smul.u32 128, %s279
        %v281 = vld [vmem:[%s2] sm:$0xff]
        %v282 = vld [vmem:[%s2 + $0x8] sm:$0xff]
        %v283 = vld [vmem:[%s251] sm:$0xff]
        %v284 = vld [vmem:[%s251 + $0x8] sm:$0xff]
        %vm285 = vcmask 130048
        %v287 = vsel %vm285, %v283, 0
        %v290 = vsel %vm285, %v284, 0
        %292 = vmatprep.subr.mxu0 0.0
        %293 = vmatpush1.msra.mxu0 %v281
        %294 = vmatprep.subr.mxu0 0.0
        %295 = vmatpush1.msra.mxu0 %v282
        %296 = vmatprep.subr.mxu0 0.0
        %297 = vmatpush1.msra.mxu0 0.0
        %298 = vmatprep.subr.mxu0 0.0
        %299 = vmatpush1.msra.mxu0 0.0
        %300 = vmatprep.subr.mxu0 0.0
        %301 = vmatpush1.msra.mxu0 0.0
        %302 = vmatprep.subr.mxu0 0.0
        %303 = vmatpush1.msra.mxu0 0.0
        %304 = vmatprep.subr.mxu0 0.0
        %305 = vmatpush1.msra.mxu0 0.0
        %306 = vmatprep.subr.mxu0 0.0
        %307 = vmatpush1.msra.mxu0 0.0
        %308 = vmatprep.subr.mxu0 0.0
        %309 = vmatpush1.msra.mxu0 0.0
        %310 = vmatprep.subr.mxu0 0.0
        %311 = vmatpush1.msra.mxu0 0.0
        %312 = vmatprep.subr.mxu0 0.0
        %313 = vmatpush1.msra.mxu0 0.0
        %314 = vmatprep.subr.mxu0 0.0
        %315 = vmatpush1.msra.mxu0 0.0
        %316 = vmatprep.subr.mxu0 0.0
        %317 = vmatpush1.msra.mxu0 0.0
        %318 = vmatprep.subr.mxu0 0.0
        %319 = vmatpush1.msra.mxu0 0.0
        %320 = vmatprep.subr.mxu0 0.0
        %321 = vmatpush1.msra.mxu0 0.0
        %322 = vmatprep.subr.mxu0 0.0
        %323 = vmatpush1.msra.mxu0 0.0
        %324 = vmatprep.subr.mxu0 0.0
        %325 = vmatpush1.msra.mxu0 0.0
        %326 = vmatprep.subr.mxu0 0.0
        %327 = vmatpush1.msra.mxu0 0.0
        %328 = vmatprep.subr.mxu0 0.0
        %329 = vmatpush1.msra.mxu0 0.0
        %330 = vmatprep.subr.mxu0 0.0
        %331 = vmatpush1.msra.mxu0 0.0
        %332 = vmatprep.subr.mxu0 0.0
        %333 = vmatpush1.msra.mxu0 0.0
        %334 = vmatprep.subr.mxu0 0.0
        %335 = vmatpush1.msra.mxu0 0.0
        %336 = vmatprep.subr.mxu0 0.0
        %337 = vmatpush1.msra.mxu0 0.0
        %338 = vmatprep.subr.mxu0 0.0
        %339 = vmatpush1.msra.mxu0 0.0
        %340 = vmatprep.subr.mxu0 0.0
        %341 = vmatpush1.msra.mxu0 0.0
        %342 = vmatprep.subr.mxu0 0.0
        %343 = vmatpush1.msra.mxu0 0.0
        %344 = vmatprep.subr.mxu0 0.0
        %345 = vmatpush1.msra.mxu0 0.0
        %346 = vmatprep.subr.mxu0 0.0
        %347 = vmatpush1.msra.mxu0 0.0
        %348 = vmatprep.subr.mxu0 0.0
        %349 = vmatpush1.msra.mxu0 0.0
        %350 = vmatprep.subr.mxu0 0.0
        %351 = vmatpush1.msra.mxu0 0.0
        %352 = vmatprep.subr.mxu0 0.0
        %353 = vmatpush1.msra.mxu0 0.0
        %354 = vmatprep.subr.mxu0 0.0
        %355 = vmatpush1.msra.mxu0 0.0
        %356 = vmatprep.mubr.f32.mxu0 0.0
        %357 = vmatmul.mubr.f32.gmra.mrb[0].mxu0 %v287
        %v358 = vpop.f32.mrb[0].mxu0
        %v359 = vadd.f32 0.0, %v358
        %v360 = vpop.f32.mrb[0].mxu0
        %361 = vmatprep.mubr.f32.mxu0 0.0
        %362 = vmatmul.mubr.f32.gmra.mrb[0].mxu0 %v290
        %v363 = vpop.f32.mrb[0].mxu0
        %v364 = vadd.f32 0.0, %v363
        %v365 = vpop.f32.mrb[0].mxu0
        %366 = vdwg.mxu0
        %v367 = vmul.f32 %v359, 0.25
        %v368 = vmul.f32 %v364, 0.25
        %369 = vst [vmem:[%s235] sm:$0xff] %v367
        %370 = vst [vmem:[%s235 + $0x8] sm:$0xff] %v368
        %v371 = vld [vmem:[%s265] sm:$0xff]
        %v372 = vld [vmem:[%s265 + $0x8] sm:$0xff]
        %v374 = vsel %vm285, %v371, 0
        %v377 = vsel %vm285, %v372, 0
        %379 = vmatprep.subr.mxu0 0.0
        %380 = vmatpush1.msra.mxu0 %v281
        %381 = vmatprep.subr.mxu0 0.0
        %382 = vmatpush1.msra.mxu0 %v282
        %383 = vmatprep.subr.mxu0 0.0
        %384 = vmatpush1.msra.mxu0 0.0
        %385 = vmatprep.subr.mxu0 0.0
        %386 = vmatpush1.msra.mxu0 0.0
        %387 = vmatprep.subr.mxu0 0.0
        %388 = vmatpush1.msra.mxu0 0.0
        %389 = vmatprep.subr.mxu0 0.0
        %390 = vmatpush1.msra.mxu0 0.0
        %391 = vmatprep.subr.mxu0 0.0
        %392 = vmatpush1.msra.mxu0 0.0
        %393 = vmatprep.subr.mxu0 0.0
        %394 = vmatpush1.msra.mxu0 0.0
        %395 = vmatprep.subr.mxu0 0.0
        %396 = vmatpush1.msra.mxu0 0.0
        %397 = vmatprep.subr.mxu0 0.0
        %398 = vmatpush1.msra.mxu0 0.0
        %399 = vmatprep.subr.mxu0 0.0
        %400 = vmatpush1.msra.mxu0 0.0
        %401 = vmatprep.subr.mxu0 0.0
        %402 = vmatpush1.msra.mxu0 0.0
        %403 = vmatprep.subr.mxu0 0.0
        %404 = vmatpush1.msra.mxu0 0.0
        %405 = vmatprep.subr.mxu0 0.0
        %406 = vmatpush1.msra.mxu0 0.0
        %407 = vmatprep.subr.mxu0 0.0
        %408 = vmatpush1.msra.mxu0 0.0
        %409 = vmatprep.subr.mxu0 0.0
        %410 = vmatpush1.msra.mxu0 0.0
        %411 = vmatprep.subr.mxu0 0.0
        %412 = vmatpush1.msra.mxu0 0.0
        %413 = vmatprep.subr.mxu0 0.0
        %414 = vmatpush1.msra.mxu0 0.0
        %415 = vmatprep.subr.mxu0 0.0
        %416 = vmatpush1.msra.mxu0 0.0
        %417 = vmatprep.subr.mxu0 0.0
        %418 = vmatpush1.msra.mxu0 0.0
        %419 = vmatprep.subr.mxu0 0.0
        %420 = vmatpush1.msra.mxu0 0.0
        %421 = vmatprep.subr.mxu0 0.0
        %422 = vmatpush1.msra.mxu0 0.0
        %423 = vmatprep.subr.mxu0 0.0
        %424 = vmatpush1.msra.mxu0 0.0
        %425 = vmatprep.subr.mxu0 0.0
        %426 = vmatpush1.msra.mxu0 0.0
        %427 = vmatprep.subr.mxu0 0.0
        %428 = vmatpush1.msra.mxu0 0.0
        %429 = vmatprep.subr.mxu0 0.0
        %430 = vmatpush1.msra.mxu0 0.0
        %431 = vmatprep.subr.mxu0 0.0
        %432 = vmatpush1.msra.mxu0 0.0
        %433 = vmatprep.subr.mxu0 0.0
        %434 = vmatpush1.msra.mxu0 0.0
        %435 = vmatprep.subr.mxu0 0.0
        %436 = vmatpush1.msra.mxu0 0.0
        %437 = vmatprep.subr.mxu0 0.0
        %438 = vmatpush1.msra.mxu0 0.0
        %439 = vmatprep.subr.mxu0 0.0
        %440 = vmatpush1.msra.mxu0 0.0
        %441 = vmatprep.subr.mxu0 0.0
        %442 = vmatpush1.msra.mxu0 0.0
        %443 = vmatprep.mubr.f32.mxu0 0.0
        %444 = vmatmul.mubr.f32.gmra.mrb[0].mxu0 %v374
        %v445 = vpop.f32.mrb[0].mxu0
        %v446 = vadd.f32 0.0, %v445
        %v447 = vpop.f32.mrb[0].mxu0
        %448 = vmatprep.mubr.f32.mxu0 0.0
        %449 = vmatmul.mubr.f32.gmra.mrb[0].mxu0 %v377
        %v450 = vpop.f32.mrb[0].mxu0
        %v451 = vadd.f32 0.0, %v450
        %v452 = vpop.f32.mrb[0].mxu0
        %453 = vdwg.mxu0
        %v454 = vmul.f32 %v446, 0.25
        %v455 = vmul.f32 %v451, 0.25
        %456 = vst [vmem:[%s242] sm:$0xff] %v454
        %457 = vst [vmem:[%s242 + $0x8] sm:$0xff] %v455
        %s458 = sand.u32 %s103, 1
        %s459 = scalar_lea.sflag [#allocation3], %s458
        %s460 = sand.u32 %s103, 1
        %s461 = smul.addr %s460, 16
        %s462 = scalar_lea.vmem [#allocation2], %s461
        %s463 = sand.u32 %s129, 1
        %s464 = scalar_lea.sflag [#allocation5], %s463
        %s465 = sand.u32 %s129, 1
        %s466 = smul.addr %s465, 16
        %s467 = scalar_lea.vmem [#allocation4], %s466
        // Predicated region
        $region33: #{tpu_custom_call.1} parent=31 // pred_check
          %p468 = pneg %p113
        $region34: #{tpu_custom_call.1} parent=31 // pred_check_branch
          %470 = sbr.rel (%p468) target = $region36
        $region35: #{tpu_custom_call.1} parent=31 // pred_region
          %s471 = smul.u32 2, %s22
          %s472 = ssub.s32 3, %s471
          %p473 = scmp.lt.s32.totalorder %s472, 2
          %s474 = scalar_select %p473, %s472, 2
          %s475 = smul.u32 128, %s474
          %s477 = ssub.s32 256, %s475
          %478 = vsyncadd %s459, %s477
          %p479 = scmp.ne.s32.totalorder 0, %s475
          %s480 = smul.addr %s471, 128
          %s481 = scalar_lea.hbm %s3, %s480
          %s482 = smul.u32 8, %s474
          %s483 = sshll.u32 %s462, 4
          %s484 = int_to_ptr.vmem [resolvable:$true] %s483
          %s485 = sshll.u32 %s482, 4
          %489 = dma.vmem_to_hbm [thread:$0]  (%p479), %s484, %s485, %s481, %s459, 128, 128, 8
        $region36: #{tpu_custom_call.1} parent=31 // pred_fallthru
          _
        // Predicated region
        $region37: #{tpu_custom_call.1} parent=31 // pred_check
          %p490 = pneg %p139
        $region38: #{tpu_custom_call.1} parent=31 // pred_check_branch
          %492 = sbr.rel (%p490) target = $region40
        $region39: #{tpu_custom_call.1} parent=31 // pred_region
          %s493 = smul.u32 2, %s22
          %s494 = ssub.s32 3, %s493
          %p495 = scmp.lt.s32.totalorder %s494, 2
          %s496 = scalar_select %p495, %s494, 2
          %s497 = smul.u32 128, %s496
          %s499 = ssub.s32 256, %s497
          %500 = vsyncadd %s464, %s499
          %p501 = scmp.ne.s32.totalorder 0, %s497
          %s502 = smul.addr %s493, 128
          %s503 = scalar_lea.hbm %s4, %s502
          %s504 = smul.u32 8, %s496
          %s505 = sshll.u32 %s467, 4
          %s506 = int_to_ptr.vmem [resolvable:$true] %s505
          %s507 = sshll.u32 %s504, 4
          %511 = dma.vmem_to_hbm [thread:$0]  (%p501), %s506, %s507, %s503, %s464, 128, 128, 8
        $region40: #{tpu_custom_call.1} parent=31 // pred_fallthru
          _
      $region32: #{tpu_custom_call.1} parent=5 // pred_fallthru
        _
      %p512 = scmp.le.s32.totalorder 2, %s17
      // Predicated region
      $region41: #{tpu_custom_call.1} parent=5 // pred_check
        %p513 = pneg %p512
      $region42: #{tpu_custom_call.1} parent=5 // pred_check_branch
        %515 = sbr.rel (%p513) target = $region44
      $region43: #{tpu_custom_call.1} parent=5 // pred_region
        %s516 = ssub.s32 %s17, 2
        // Predicated region
        $region45: #{tpu_custom_call.1} parent=43 // pred_check
          %p517 = pneg %p119
        $region46: #{tpu_custom_call.1} parent=43 // pred_check_branch
          %519 = sbr.rel (%p517) target = $region48
        $region47: #{tpu_custom_call.1} parent=43 // pred_region
          %s520 = sand.u32 %s104, 1
          %s521 = scalar_lea.sflag [#allocation3], %s520
          %s522 = sand.u32 %s104, 1
          %s523 = smul.addr %s522, 16
          %s524 = scalar_lea.vmem [#allocation2], %s523
          %525 = dma.done %s521, 256
        $region48: #{tpu_custom_call.1} parent=43 // pred_fallthru
          _
        // Predicated region
        $region49: #{tpu_custom_call.1} parent=43 // pred_check
          %p526 = pneg %p145
        $region50: #{tpu_custom_call.1} parent=43 // pred_check_branch
          %528 = sbr.rel (%p526) target = $region52
        $region51: #{tpu_custom_call.1} parent=43 // pred_region
          %s529 = sand.u32 %s130, 1
          %s530 = scalar_lea.sflag [#allocation5], %s529
          %s531 = sand.u32 %s130, 1
          %s532 = smul.addr %s531, 16
          %s533 = scalar_lea.vmem [#allocation4], %s532
          %534 = dma.done %s530, 256
        $region52: #{tpu_custom_call.1} parent=43 // pred_fallthru
          _
      $region44: #{tpu_custom_call.1} parent=5 // pred_fallthru
        _
    $region6: #{tpu_custom_call.1} parent=1 // loop_footer
      %s21 = sadd.s32 1, %s17
    $region7: #{tpu_custom_call.1} parent=1 // loop_footer_branch
      %16 = sbr.rel target = $region3
    $region8: #{tpu_custom_call.1} parent=1 // loop_exit
      _
    %535 = vsyncpa [#allocation3], 1
    %s536 = scalar_lea.sflag [#allocation3], 1
    %537 = vsyncpa %s536, 1
    %538 = vsyncpa [#allocation5], 1
    %s539 = scalar_lea.sflag [#allocation5], 1
    %540 = vsyncpa %s539, 1

</llo_original>
